<compile_context>
chip_gen: v7x
topology: tpu7x:2x2x1
jax: 0.10.0
libtpu: 0.0.40
codegen_flags: <defaults>
</compile_context>

<pallas_src>
import functools

import jax
import jax.numpy as jnp
from jax.experimental import pallas as pl
from jax.experimental.pallas import tpu as pltpu


def _round_up(x: int, m: int) -> int:
    return (x + m - 1) // m * m


def cbow_kernel(x_sref, emb_ref, w_ref, b_ref, out_ref, mean_ref):
    # x_sref : (B_pad, C)     int32, SMEM (scalar-prefetched token ids)
    # emb_ref: (V_pad, D_pad) f32, full embedding table resident in VMEM
    # w_ref  : (TV, D_pad)    f32, Linear weight tile (original (V, D) layout)
    # b_ref  : (1, TV)        f32, Linear bias tile
    # out_ref: (TB, TV)       f32, scores tile
    # mean_ref: (TB, D_pad)   f32 scratch, context-mean embeddings
    i = pl.program_id(0)          # batch tile
    j = pl.program_id(1)          # vocab (output) tile
    tb, d_pad = mean_ref.shape
    ctx = x_sref.shape[1]

    # Gather + mean once per batch tile; scratch persists across the inner
    # ("arbitrary") vocab axis.
    @pl.when(j == 0)
    def _():
        base = i * tb
        inv_c = 1.0 / ctx
        for r in range(tb):                       # static unroll (tb == 8)
            row = jnp.zeros((1, d_pad), jnp.float32)
            for c in range(ctx):                  # static unroll (small C)
                tok = x_sref[base + r, c]         # scalar read from SMEM
                row = row + emb_ref[pl.ds(tok, 1), :]
            mean_ref[pl.ds(r, 1), :] = row * inv_c

    # Linear: (TB, D) x (TV, D)^T on the MXU in bf16, f32 accumulation.
    # Contraction on D of the original-layout weight -> no HBM-side transpose.
    mean_bf = mean_ref[...].astype(jnp.bfloat16)
    w_bf = w_ref[...].astype(jnp.bfloat16)
    scores = jax.lax.dot_general(
        mean_bf, w_bf,
        dimension_numbers=(((1,), (1,)), ((), ())),
        preferred_element_type=jnp.float32)
    out_ref[...] = scores + b_ref[...]


@functools.partial(jax.jit, static_argnames=("tb", "tv"))
def cbow_forward(x, emb, w, b, *, tb=8, tv=512):
    """CBOW forward.

    x  : (B, C) integer token ids
    emb: (V, D) embedding table
    w  : (V, D) nn.Linear weight (PyTorch layout)
    b  : (V,)   nn.Linear bias
    returns (B, V) f32 scores
    """
    B, C = x.shape
    V, D = emb.shape

    d_pad = _round_up(D, 128)
    tv = min(tv, _round_up(V, 128))       # lane-dense multiple of 128
    v_pad = _round_up(V, tv)
    b_pad = _round_up(B, tb)

    x_p = jnp.zeros((b_pad, C), jnp.int32).at[:B].set(x.astype(jnp.int32))
    emb_p = jnp.zeros((v_pad, d_pad), jnp.float32).at[:V, :D].set(emb)
    w_p = jnp.zeros((v_pad, d_pad), jnp.float32).at[:V, :D].set(w)
    bias_p = jnp.zeros((1, v_pad), jnp.float32).at[0, :V].set(b)

    grid = (b_pad // tb, v_pad // tv)

    cost = pl.CostEstimate(
        flops=2 * b_pad * d_pad * v_pad + 2 * b_pad * C * d_pad,
        transcendentals=0,
        bytes_accessed=(x_p.size * 4 + emb_p.size * 4 + w_p.size * 4
                        + bias_p.size * 4 + b_pad * v_pad * 4),
    )

    out = pl.pallas_call(
        cbow_kernel,
        out_shape=jax.ShapeDtypeStruct((b_pad, v_pad), jnp.float32),
        grid_spec=pltpu.PrefetchScalarGridSpec(
            num_scalar_prefetch=1,                      # token ids -> SMEM
            grid=grid,
            in_specs=[
                # Full embedding table, resident across the whole grid.
                # TODO(synk): for vocabularies too large for VMEM, move emb to
                # memory_space=pl.ANY and gather rows via manual async copies.
                pl.BlockSpec((v_pad, d_pad), lambda i, j, xs: (0, 0)),
                # Linear weight streamed in (TV, D) tiles, original layout.
                pl.BlockSpec((tv, d_pad), lambda i, j, xs: (j, 0)),
                # Bias tile.
                pl.BlockSpec((1, tv), lambda i, j, xs: (0, j)),
            ],
            out_specs=pl.BlockSpec((tb, tv), lambda i, j, xs: (i, j)),
            scratch_shapes=[pltpu.VMEM((tb, d_pad), jnp.float32)],
        ),
        compiler_params=pltpu.CompilerParams(
            dimension_semantics=("parallel", "arbitrary"),
        ),
        cost_estimate=cost,
    )(x_p, emb_p, w_p, bias_p)

    return out[:B, :V]


if __name__ == "__main__":
    vocab_size = 50
    embedding_dim = 100
    batch = 2
    context_len = 8

    key = jax.random.PRNGKey(0)
    k_x, k_emb, k_w, k_b = jax.random.split(key, 4)

    x = jax.random.randint(k_x, (batch, context_len), 0, vocab_size,
                           dtype=jnp.int32)
    emb = jax.random.normal(k_emb, (vocab_size, embedding_dim),
                            dtype=jnp.float32)
    w = jax.random.normal(k_w, (vocab_size, embedding_dim),
                          dtype=jnp.float32) * 0.1       # nn.Linear weight (V, D)
    b = jax.random.normal(k_b, (vocab_size,), dtype=jnp.float32) * 0.1

    scores = cbow_forward(x, emb, w, b)
    jax.block_until_ready(scores)

    # Pure-JAX f32 reference (gather -> mean -> linear).  The kernel runs the
    # matmul in bf16 on the MXU (f32 accumulation), so tolerance is loosened.
    ref = jnp.take(emb, x, axis=0).mean(axis=1) @ w.T + b
    assert scores.shape == (batch, vocab_size)
    assert jnp.allclose(scores, ref, atol=3e-2, rtol=3e-2), (
        float(jnp.max(jnp.abs(scores - ref))))

    print("KERNEL_OK")
</pallas_src>

<mosaic_0001>
module attributes {stable_mosaic.version = 11 : i64} {
  func.func @cbow_kernel(%arg0: i32, %arg1: i32, %arg2: memref<8x8xi32, #tpu.memory_space<smem>>, %arg3: memref<128x128xf32, #tpu.memory_space<vmem>>, %arg4: memref<128x128xf32, #tpu.memory_space<vmem>>, %arg5: memref<1x128xf32, #tpu.memory_space<vmem>>, %arg6: memref<8x128xf32, #tpu.memory_space<vmem>>, %arg7: memref<8x128xf32, #tpu.memory_space<vmem>>) attributes {dimension_semantics = [#tpu.dimension_semantics<parallel>, #tpu.dimension_semantics<arbitrary>], iteration_bounds = array<i64: 1, 1>, scalar_prefetch = 1 : i64, scratch_operands = 1 : i64, tpu.core_type = #tpu.core_type<tc>, window_params = [{pipeline_mode = #tpu.pipeline_mode<synchronous>, transform_indices = @transform_0, window_bounds = array<i64: 128, 128>}, {transform_indices = @transform_1, window_bounds = array<i64: 128, 128>}, {transform_indices = @transform_2, window_bounds = array<i64: 1, 128>}, {transform_indices = @transform_3, window_bounds = array<i64: 8, 128>}]} {
    %c0_i32 = arith.constant 0 : i32
    %0 = arith.cmpi eq, %arg1, %c0_i32 : i32
    %1 = arith.extui %0 : i1 to i32
    %c0_i32_0 = arith.constant 0 : i32
    %2 = arith.cmpi ne, %1, %c0_i32_0 : i32
    scf.if %2 {
      %c8_i32 = arith.constant 8 : i32
      %12 = arith.muli %arg0, %c8_i32 : i32
      %cst_8 = arith.constant 0.000000e+00 : f32
      %13 = vector.broadcast %cst_8 : f32 to vector<1x128xf32>
      %c0_i32_9 = arith.constant 0 : i32
      %14 = arith.addi %12, %c0_i32_9 : i32
      %15 = arith.index_cast %14 : i32 to index
      %c0_10 = arith.constant 0 : index
      %16 = memref.load %arg2[%15, %c0_10] : memref<8x8xi32, #tpu.memory_space<smem>>
      %17 = arith.index_cast %16 : i32 to index
      %c0_11 = arith.constant 0 : index
      %18 = vector.load %arg3[%17, %c0_11] : memref<128x128xf32, #tpu.memory_space<vmem>>, vector<1x128xf32>
      %19 = arith.addf %13, %18 : vector<1x128xf32>
      %c0_i32_12 = arith.constant 0 : i32
      %20 = arith.addi %12, %c0_i32_12 : i32
      %21 = arith.index_cast %20 : i32 to index
      %c1 = arith.constant 1 : index
      %22 = memref.load %arg2[%21, %c1] : memref<8x8xi32, #tpu.memory_space<smem>>
      %23 = arith.index_cast %22 : i32 to index
      %c0_13 = arith.constant 0 : index
      %24 = vector.load %arg3[%23, %c0_13] : memref<128x128xf32, #tpu.memory_space<vmem>>, vector<1x128xf32>
      %25 = arith.addf %19, %24 : vector<1x128xf32>
      %c0_i32_14 = arith.constant 0 : i32
      %26 = arith.addi %12, %c0_i32_14 : i32
      %27 = arith.index_cast %26 : i32 to index
      %c2 = arith.constant 2 : index
      %28 = memref.load %arg2[%27, %c2] : memref<8x8xi32, #tpu.memory_space<smem>>
      %29 = arith.index_cast %28 : i32 to index
      %c0_15 = arith.constant 0 : index
      %30 = vector.load %arg3[%29, %c0_15] : memref<128x128xf32, #tpu.memory_space<vmem>>, vector<1x128xf32>
      %31 = arith.addf %25, %30 : vector<1x128xf32>
      %c0_i32_16 = arith.constant 0 : i32
      %32 = arith.addi %12, %c0_i32_16 : i32
      %33 = arith.index_cast %32 : i32 to index
      %c3 = arith.constant 3 : index
      %34 = memref.load %arg2[%33, %c3] : memref<8x8xi32, #tpu.memory_space<smem>>
      %35 = arith.index_cast %34 : i32 to index
      %c0_17 = arith.constant 0 : index
      %36 = vector.load %arg3[%35, %c0_17] : memref<128x128xf32, #tpu.memory_space<vmem>>, vector<1x128xf32>
      %37 = arith.addf %31, %36 : vector<1x128xf32>
      %c0_i32_18 = arith.constant 0 : i32
      %38 = arith.addi %12, %c0_i32_18 : i32
      %39 = arith.index_cast %38 : i32 to index
      %c4 = arith.constant 4 : index
      %40 = memref.load %arg2[%39, %c4] : memref<8x8xi32, #tpu.memory_space<smem>>
      %41 = arith.index_cast %40 : i32 to index
      %c0_19 = arith.constant 0 : index
      %42 = vector.load %arg3[%41, %c0_19] : memref<128x128xf32, #tpu.memory_space<vmem>>, vector<1x128xf32>
      %43 = arith.addf %37, %42 : vector<1x128xf32>
      %c0_i32_20 = arith.constant 0 : i32
      %44 = arith.addi %12, %c0_i32_20 : i32
      %45 = arith.index_cast %44 : i32 to index
      %c5 = arith.constant 5 : index
      %46 = memref.load %arg2[%45, %c5] : memref<8x8xi32, #tpu.memory_space<smem>>
      %47 = arith.index_cast %46 : i32 to index
      %c0_21 = arith.constant 0 : index
      %48 = vector.load %arg3[%47, %c0_21] : memref<128x128xf32, #tpu.memory_space<vmem>>, vector<1x128xf32>
      %49 = arith.addf %43, %48 : vector<1x128xf32>
      %c0_i32_22 = arith.constant 0 : i32
      %50 = arith.addi %12, %c0_i32_22 : i32
      %51 = arith.index_cast %50 : i32 to index
      %c6 = arith.constant 6 : index
      %52 = memref.load %arg2[%51, %c6] : memref<8x8xi32, #tpu.memory_space<smem>>
      %53 = arith.index_cast %52 : i32 to index
      %c0_23 = arith.constant 0 : index
      %54 = vector.load %arg3[%53, %c0_23] : memref<128x128xf32, #tpu.memory_space<vmem>>, vector<1x128xf32>
      %55 = arith.addf %49, %54 : vector<1x128xf32>
      %c0_i32_24 = arith.constant 0 : i32
      %56 = arith.addi %12, %c0_i32_24 : i32
      %57 = arith.index_cast %56 : i32 to index
      %c7 = arith.constant 7 : index
      %58 = memref.load %arg2[%57, %c7] : memref<8x8xi32, #tpu.memory_space<smem>>
      %59 = arith.index_cast %58 : i32 to index
      %c0_25 = arith.constant 0 : index
      %60 = vector.load %arg3[%59, %c0_25] : memref<128x128xf32, #tpu.memory_space<vmem>>, vector<1x128xf32>
      %61 = arith.addf %55, %60 : vector<1x128xf32>
      %cst_26 = arith.constant 1.250000e-01 : f32
      %62 = vector.broadcast %cst_26 : f32 to vector<1x128xf32>
      %63 = arith.mulf %61, %62 : vector<1x128xf32>
      %c0_27 = arith.constant 0 : index
      %c0_28 = arith.constant 0 : index
      %64 = vector.load %arg7[%c0_27, %c0_28] : memref<8x128xf32, #tpu.memory_space<vmem>>, vector<1x128xf32>
      tpu.vector_store %arg7[%c0_27, %c0_28], %63 {strides = array<i32>} : memref<8x128xf32, #tpu.memory_space<vmem>>, vector<1x128xf32>,
      %cst_29 = arith.constant 0.000000e+00 : f32
      %65 = vector.broadcast %cst_29 : f32 to vector<1x128xf32>
      %c1_i32 = arith.constant 1 : i32
      %66 = arith.addi %12, %c1_i32 : i32
      %67 = arith.index_cast %66 : i32 to index
      %c0_30 = arith.constant 0 : index
      %68 = memref.load %arg2[%67, %c0_30] : memref<8x8xi32, #tpu.memory_space<smem>>
      %69 = arith.index_cast %68 : i32 to index
      %c0_31 = arith.constant 0 : index
      %70 = vector.load %arg3[%69, %c0_31] : memref<128x128xf32, #tpu.memory_space<vmem>>, vector<1x128xf32>
      %71 = arith.addf %65, %70 : vector<1x128xf32>
      %c1_i32_32 = arith.constant 1 : i32
      %72 = arith.addi %12, %c1_i32_32 : i32
      %73 = arith.index_cast %72 : i32 to index
      %c1_33 = arith.constant 1 : index
      %74 = memref.load %arg2[%73, %c1_33] : memref<8x8xi32, #tpu.memory_space<smem>>
      %75 = arith.index_cast %74 : i32 to index
      %c0_34 = arith.constant 0 : index
      %76 = vector.load %arg3[%75, %c0_34] : memref<128x128xf32, #tpu.memory_space<vmem>>, vector<1x128xf32>
      %77 = arith.addf %71, %76 : vector<1x128xf32>
      %c1_i32_35 = arith.constant 1 : i32
      %78 = arith.addi %12, %c1_i32_35 : i32
      %79 = arith.index_cast %78 : i32 to index
      %c2_36 = arith.constant 2 : index
      %80 = memref.load %arg2[%79, %c2_36] : memref<8x8xi32, #tpu.memory_space<smem>>
      %81 = arith.index_cast %80 : i32 to index
      %c0_37 = arith.constant 0 : index
      %82 = vector.load %arg3[%81, %c0_37] : memref<128x128xf32, #tpu.memory_space<vmem>>, vector<1x128xf32>
      %83 = arith.addf %77, %82 : vector<1x128xf32>
      %c1_i32_38 = arith.constant 1 : i32
      %84 = arith.addi %12, %c1_i32_38 : i32
      %85 = arith.index_cast %84 : i32 to index
      %c3_39 = arith.constant 3 : index
      %86 = memref.load %arg2[%85, %c3_39] : memref<8x8xi32, #tpu.memory_space<smem>>
      %87 = arith.index_cast %86 : i32 to index
      %c0_40 = arith.constant 0 : index
      %88 = vector.load %arg3[%87, %c0_40] : memref<128x128xf32, #tpu.memory_space<vmem>>, vector<1x128xf32>
      %89 = arith.addf %83, %88 : vector<1x128xf32>
      %c1_i32_41 = arith.constant 1 : i32
      %90 = arith.addi %12, %c1_i32_41 : i32
      %91 = arith.index_cast %90 : i32 to index
      %c4_42 = arith.constant 4 : index
      %92 = memref.load %arg2[%91, %c4_42] : memref<8x8xi32, #tpu.memory_space<smem>>
      %93 = arith.index_cast %92 : i32 to index
      %c0_43 = arith.constant 0 : index
      %94 = vector.load %arg3[%93, %c0_43] : memref<128x128xf32, #tpu.memory_space<vmem>>, vector<1x128xf32>
      %95 = arith.addf %89, %94 : vector<1x128xf32>
      %c1_i32_44 = arith.constant 1 : i32
      %96 = arith.addi %12, %c1_i32_44 : i32
      %97 = arith.index_cast %96 : i32 to index
      %c5_45 = arith.constant 5 : index
      %98 = memref.load %arg2[%97, %c5_45] : memref<8x8xi32, #tpu.memory_space<smem>>
      %99 = arith.index_cast %98 : i32 to index
      %c0_46 = arith.constant 0 : index
      %100 = vector.load %arg3[%99, %c0_46] : memref<128x128xf32, #tpu.memory_space<vmem>>, vector<1x128xf32>
      %101 = arith.addf %95, %100 : vector<1x128xf32>
      %c1_i32_47 = arith.constant 1 : i32
      %102 = arith.addi %12, %c1_i32_47 : i32
      %103 = arith.index_cast %102 : i32 to index
      %c6_48 = arith.constant 6 : index
      %104 = memref.load %arg2[%103, %c6_48] : memref<8x8xi32, #tpu.memory_space<smem>>
      %105 = arith.index_cast %104 : i32 to index
      %c0_49 = arith.constant 0 : index
      %106 = vector.load %arg3[%105, %c0_49] : memref<128x128xf32, #tpu.memory_space<vmem>>, vector<1x128xf32>
      %107 = arith.addf %101, %106 : vector<1x128xf32>
      %c1_i32_50 = arith.constant 1 : i32
      %108 = arith.addi %12, %c1_i32_50 : i32
      %109 = arith.index_cast %108 : i32 to index
      %c7_51 = arith.constant 7 : index
      %110 = memref.load %arg2[%109, %c7_51] : memref<8x8xi32, #tpu.memory_space<smem>>
      %111 = arith.index_cast %110 : i32 to index
      %c0_52 = arith.constant 0 : index
      %112 = vector.load %arg3[%111, %c0_52] : memref<128x128xf32, #tpu.memory_space<vmem>>, vector<1x128xf32>
      %113 = arith.addf %107, %112 : vector<1x128xf32>
      %cst_53 = arith.constant 1.250000e-01 : f32
      %114 = vector.broadcast %cst_53 : f32 to vector<1x128xf32>
      %115 = arith.mulf %113, %114 : vector<1x128xf32>
      %c1_54 = arith.constant 1 : index
      %c0_55 = arith.constant 0 : index
      %116 = vector.load %arg7[%c1_54, %c0_55] : memref<8x128xf32, #tpu.memory_space<vmem>>, vector<1x128xf32>
      tpu.vector_store %arg7[%c1_54, %c0_55], %115 {strides = array<i32>} : memref<8x128xf32, #tpu.memory_space<vmem>>, vector<1x128xf32>,
      %cst_56 = arith.constant 0.000000e+00 : f32
      %117 = vector.broadcast %cst_56 : f32 to vector<1x128xf32>
      %c2_i32 = arith.constant 2 : i32
      %118 = arith.addi %12, %c2_i32 : i32
      %119 = arith.index_cast %118 : i32 to index
      %c0_57 = arith.constant 0 : index
      %120 = memref.load %arg2[%119, %c0_57] : memref<8x8xi32, #tpu.memory_space<smem>>
      %121 = arith.index_cast %120 : i32 to index
      %c0_58 = arith.constant 0 : index
      %122 = vector.load %arg3[%121, %c0_58] : memref<128x128xf32, #tpu.memory_space<vmem>>, vector<1x128xf32>
      %123 = arith.addf %117, %122 : vector<1x128xf32>
      %c2_i32_59 = arith.constant 2 : i32
      %124 = arith.addi %12, %c2_i32_59 : i32
      %125 = arith.index_cast %124 : i32 to index
      %c1_60 = arith.constant 1 : index
      %126 = memref.load %arg2[%125, %c1_60] : memref<8x8xi32, #tpu.memory_space<smem>>
      %127 = arith.index_cast %126 : i32 to index
      %c0_61 = arith.constant 0 : index
      %128 = vector.load %arg3[%127, %c0_61] : memref<128x128xf32, #tpu.memory_space<vmem>>, vector<1x128xf32>
      %129 = arith.addf %123, %128 : vector<1x128xf32>
      %c2_i32_62 = arith.constant 2 : i32
      %130 = arith.addi %12, %c2_i32_62 : i32
      %131 = arith.index_cast %130 : i32 to index
      %c2_63 = arith.constant 2 : index
      %132 = memref.load %arg2[%131, %c2_63] : memref<8x8xi32, #tpu.memory_space<smem>>
      %133 = arith.index_cast %132 : i32 to index
      %c0_64 = arith.constant 0 : index
      %134 = vector.load %arg3[%133, %c0_64] : memref<128x128xf32, #tpu.memory_space<vmem>>, vector<1x128xf32>
      %135 = arith.addf %129, %134 : vector<1x128xf32>
      %c2_i32_65 = arith.constant 2 : i32
      %136 = arith.addi %12, %c2_i32_65 : i32
      %137 = arith.index_cast %136 : i32 to index
      %c3_66 = arith.constant 3 : index
      %138 = memref.load %arg2[%137, %c3_66] : memref<8x8xi32, #tpu.memory_space<smem>>
      %139 = arith.index_cast %138 : i32 to index
      %c0_67 = arith.constant 0 : index
      %140 = vector.load %arg3[%139, %c0_67] : memref<128x128xf32, #tpu.memory_space<vmem>>, vector<1x128xf32>
      %141 = arith.addf %135, %140 : vector<1x128xf32>
      %c2_i32_68 = arith.constant 2 : i32
      %142 = arith.addi %12, %c2_i32_68 : i32
      %143 = arith.index_cast %142 : i32 to index
      %c4_69 = arith.constant 4 : index
      %144 = memref.load %arg2[%143, %c4_69] : memref<8x8xi32, #tpu.memory_space<smem>>
      %145 = arith.index_cast %144 : i32 to index
      %c0_70 = arith.constant 0 : index
      %146 = vector.load %arg3[%145, %c0_70] : memref<128x128xf32, #tpu.memory_space<vmem>>, vector<1x128xf32>
      %147 = arith.addf %141, %146 : vector<1x128xf32>
      %c2_i32_71 = arith.constant 2 : i32
      %148 = arith.addi %12, %c2_i32_71 : i32
      %149 = arith.index_cast %148 : i32 to index
      %c5_72 = arith.constant 5 : index
      %150 = memref.load %arg2[%149, %c5_72] : memref<8x8xi32, #tpu.memory_space<smem>>
      %151 = arith.index_cast %150 : i32 to index
      %c0_73 = arith.constant 0 : index
      %152 = vector.load %arg3[%151, %c0_73] : memref<128x128xf32, #tpu.memory_space<vmem>>, vector<1x128xf32>
      %153 = arith.addf %147, %152 : vector<1x128xf32>
      %c2_i32_74 = arith.constant 2 : i32
      %154 = arith.addi %12, %c2_i32_74 : i32
      %155 = arith.index_cast %154 : i32 to index
      %c6_75 = arith.constant 6 : index
      %156 = memref.load %arg2[%155, %c6_75] : memref<8x8xi32, #tpu.memory_space<smem>>
      %157 = arith.index_cast %156 : i32 to index
      %c0_76 = arith.constant 0 : index
      %158 = vector.load %arg3[%157, %c0_76] : memref<128x128xf32, #tpu.memory_space<vmem>>, vector<1x128xf32>
      %159 = arith.addf %153, %158 : vector<1x128xf32>
      %c2_i32_77 = arith.constant 2 : i32
      %160 = arith.addi %12, %c2_i32_77 : i32
      %161 = arith.index_cast %160 : i32 to index
      %c7_78 = arith.constant 7 : index
      %162 = memref.load %arg2[%161, %c7_78] : memref<8x8xi32, #tpu.memory_space<smem>>
      %163 = arith.index_cast %162 : i32 to index
      %c0_79 = arith.constant 0 : index
      %164 = vector.load %arg3[%163, %c0_79] : memref<128x128xf32, #tpu.memory_space<vmem>>, vector<1x128xf32>
      %165 = arith.addf %159, %164 : vector<1x128xf32>
      %cst_80 = arith.constant 1.250000e-01 : f32
      %166 = vector.broadcast %cst_80 : f32 to vector<1x128xf32>
      %167 = arith.mulf %165, %166 : vector<1x128xf32>
      %c2_81 = arith.constant 2 : index
      %c0_82 = arith.constant 0 : index
      %168 = vector.load %arg7[%c2_81, %c0_82] : memref<8x128xf32, #tpu.memory_space<vmem>>, vector<1x128xf32>
      tpu.vector_store %arg7[%c2_81, %c0_82], %167 {strides = array<i32>} : memref<8x128xf32, #tpu.memory_space<vmem>>, vector<1x128xf32>,
      %cst_83 = arith.constant 0.000000e+00 : f32
      %169 = vector.broadcast %cst_83 : f32 to vector<1x128xf32>
      %c3_i32 = arith.constant 3 : i32
      %170 = arith.addi %12, %c3_i32 : i32
      %171 = arith.index_cast %170 : i32 to index
      %c0_84 = arith.constant 0 : index
      %172 = memref.load %arg2[%171, %c0_84] : memref<8x8xi32, #tpu.memory_space<smem>>
      %173 = arith.index_cast %172 : i32 to index
      %c0_85 = arith.constant 0 : index
      %174 = vector.load %arg3[%173, %c0_85] : memref<128x128xf32, #tpu.memory_space<vmem>>, vector<1x128xf32>
      %175 = arith.addf %169, %174 : vector<1x128xf32>
      %c3_i32_86 = arith.constant 3 : i32
      %176 = arith.addi %12, %c3_i32_86 : i32
      %177 = arith.index_cast %176 : i32 to index
      %c1_87 = arith.constant 1 : index
      %178 = memref.load %arg2[%177, %c1_87] : memref<8x8xi32, #tpu.memory_space<smem>>
      %179 = arith.index_cast %178 : i32 to index
      %c0_88 = arith.constant 0 : index
      %180 = vector.load %arg3[%179, %c0_88] : memref<128x128xf32, #tpu.memory_space<vmem>>, vector<1x128xf32>
      %181 = arith.addf %175, %180 : vector<1x128xf32>
      %c3_i32_89 = arith.constant 3 : i32
      %182 = arith.addi %12, %c3_i32_89 : i32
      %183 = arith.index_cast %182 : i32 to index
      %c2_90 = arith.constant 2 : index
      %184 = memref.load %arg2[%183, %c2_90] : memref<8x8xi32, #tpu.memory_space<smem>>
      %185 = arith.index_cast %184 : i32 to index
      %c0_91 = arith.constant 0 : index
      %186 = vector.load %arg3[%185, %c0_91] : memref<128x128xf32, #tpu.memory_space<vmem>>, vector<1x128xf32>
      %187 = arith.addf %181, %186 : vector<1x128xf32>
      %c3_i32_92 = arith.constant 3 : i32
      %188 = arith.addi %12, %c3_i32_92 : i32
      %189 = arith.index_cast %188 : i32 to index
      %c3_93 = arith.constant 3 : index
      %190 = memref.load %arg2[%189, %c3_93] : memref<8x8xi32, #tpu.memory_space<smem>>
      %191 = arith.index_cast %190 : i32 to index
      %c0_94 = arith.constant 0 : index
      %192 = vector.load %arg3[%191, %c0_94] : memref<128x128xf32, #tpu.memory_space<vmem>>, vector<1x128xf32>
      %193 = arith.addf %187, %192 : vector<1x128xf32>
      %c3_i32_95 = arith.constant 3 : i32
      %194 = arith.addi %12, %c3_i32_95 : i32
      %195 = arith.index_cast %194 : i32 to index
      %c4_96 = arith.constant 4 : index
      %196 = memref.load %arg2[%195, %c4_96] : memref<8x8xi32, #tpu.memory_space<smem>>
      %197 = arith.index_cast %196 : i32 to index
      %c0_97 = arith.constant 0 : index
      %198 = vector.load %arg3[%197, %c0_97] : memref<128x128xf32, #tpu.memory_space<vmem>>, vector<1x128xf32>
      %199 = arith.addf %193, %198 : vector<1x128xf32>
      %c3_i32_98 = arith.constant 3 : i32
      %200 = arith.addi %12, %c3_i32_98 : i32
      %201 = arith.index_cast %200 : i32 to index
      %c5_99 = arith.constant 5 : index
      %202 = memref.load %arg2[%201, %c5_99] : memref<8x8xi32, #tpu.memory_space<smem>>
      %203 = arith.index_cast %202 : i32 to index
      %c0_100 = arith.constant 0 : index
      %204 = vector.load %arg3[%203, %c0_100] : memref<128x128xf32, #tpu.memory_space<vmem>>, vector<1x128xf32>
      %205 = arith.addf %199, %204 : vector<1x128xf32>
      %c3_i32_101 = arith.constant 3 : i32
      %206 = arith.addi %12, %c3_i32_101 : i32
      %207 = arith.index_cast %206 : i32 to index
      %c6_102 = arith.constant 6 : index
      %208 = memref.load %arg2[%207, %c6_102] : memref<8x8xi32, #tpu.memory_space<smem>>
      %209 = arith.index_cast %208 : i32 to index
      %c0_103 = arith.constant 0 : index
      %210 = vector.load %arg3[%209, %c0_103] : memref<128x128xf32, #tpu.memory_space<vmem>>, vector<1x128xf32>
      %211 = arith.addf %205, %210 : vector<1x128xf32>
      %c3_i32_104 = arith.constant 3 : i32
      %212 = arith.addi %12, %c3_i32_104 : i32
      %213 = arith.index_cast %212 : i32 to index
      %c7_105 = arith.constant 7 : index
      %214 = memref.load %arg2[%213, %c7_105] : memref<8x8xi32, #tpu.memory_space<smem>>
      %215 = arith.index_cast %214 : i32 to index
      %c0_106 = arith.constant 0 : index
      %216 = vector.load %arg3[%215, %c0_106] : memref<128x128xf32, #tpu.memory_space<vmem>>, vector<1x128xf32>
      %217 = arith.addf %211, %216 : vector<1x128xf32>
      %cst_107 = arith.constant 1.250000e-01 : f32
      %218 = vector.broadcast %cst_107 : f32 to vector<1x128xf32>
      %219 = arith.mulf %217, %218 : vector<1x128xf32>
      %c3_108 = arith.constant 3 : index
      %c0_109 = arith.constant 0 : index
      %220 = vector.load %arg7[%c3_108, %c0_109] : memref<8x128xf32, #tpu.memory_space<vmem>>, vector<1x128xf32>
      tpu.vector_store %arg7[%c3_108, %c0_109], %219 {strides = array<i32>} : memref<8x128xf32, #tpu.memory_space<vmem>>, vector<1x128xf32>,
      %cst_110 = arith.constant 0.000000e+00 : f32
      %221 = vector.broadcast %cst_110 : f32 to vector<1x128xf32>
      %c4_i32 = arith.constant 4 : i32
      %222 = arith.addi %12, %c4_i32 : i32
      %223 = arith.index_cast %222 : i32 to index
      %c0_111 = arith.constant 0 : index
      %224 = memref.load %arg2[%223, %c0_111] : memref<8x8xi32, #tpu.memory_space<smem>>
      %225 = arith.index_cast %224 : i32 to index
      %c0_112 = arith.constant 0 : index
      %226 = vector.load %arg3[%225, %c0_112] : memref<128x128xf32, #tpu.memory_space<vmem>>, vector<1x128xf32>
      %227 = arith.addf %221, %226 : vector<1x128xf32>
      %c4_i32_113 = arith.constant 4 : i32
      %228 = arith.addi %12, %c4_i32_113 : i32
      %229 = arith.index_cast %228 : i32 to index
      %c1_114 = arith.constant 1 : index
      %230 = memref.load %arg2[%229, %c1_114] : memref<8x8xi32, #tpu.memory_space<smem>>
      %231 = arith.index_cast %230 : i32 to index
      %c0_115 = arith.constant 0 : index
      %232 = vector.load %arg3[%231, %c0_115] : memref<128x128xf32, #tpu.memory_space<vmem>>, vector<1x128xf32>
      %233 = arith.addf %227, %232 : vector<1x128xf32>
      %c4_i32_116 = arith.constant 4 : i32
      %234 = arith.addi %12, %c4_i32_116 : i32
      %235 = arith.index_cast %234 : i32 to index
      %c2_117 = arith.constant 2 : index
      %236 = memref.load %arg2[%235, %c2_117] : memref<8x8xi32, #tpu.memory_space<smem>>
      %237 = arith.index_cast %236 : i32 to index
      %c0_118 = arith.constant 0 : index
      %238 = vector.load %arg3[%237, %c0_118] : memref<128x128xf32, #tpu.memory_space<vmem>>, vector<1x128xf32>
      %239 = arith.addf %233, %238 : vector<1x128xf32>
      %c4_i32_119 = arith.constant 4 : i32
      %240 = arith.addi %12, %c4_i32_119 : i32
      %241 = arith.index_cast %240 : i32 to index
      %c3_120 = arith.constant 3 : index
      %242 = memref.load %arg2[%241, %c3_120] : memref<8x8xi32, #tpu.memory_space<smem>>
      %243 = arith.index_cast %242 : i32 to index
      %c0_121 = arith.constant 0 : index
      %244 = vector.load %arg3[%243, %c0_121] : memref<128x128xf32, #tpu.memory_space<vmem>>, vector<1x128xf32>
      %245 = arith.addf %239, %244 : vector<1x128xf32>
      %c4_i32_122 = arith.constant 4 : i32
      %246 = arith.addi %12, %c4_i32_122 : i32
      %247 = arith.index_cast %246 : i32 to index
      %c4_123 = arith.constant 4 : index
      %248 = memref.load %arg2[%247, %c4_123] : memref<8x8xi32, #tpu.memory_space<smem>>
      %249 = arith.index_cast %248 : i32 to index
      %c0_124 = arith.constant 0 : index
      %250 = vector.load %arg3[%249, %c0_124] : memref<128x128xf32, #tpu.memory_space<vmem>>, vector<1x128xf32>
      %251 = arith.addf %245, %250 : vector<1x128xf32>
      %c4_i32_125 = arith.constant 4 : i32
      %252 = arith.addi %12, %c4_i32_125 : i32
      %253 = arith.index_cast %252 : i32 to index
      %c5_126 = arith.constant 5 : index
      %254 = memref.load %arg2[%253, %c5_126] : memref<8x8xi32, #tpu.memory_space<smem>>
      %255 = arith.index_cast %254 : i32 to index
      %c0_127 = arith.constant 0 : index
      %256 = vector.load %arg3[%255, %c0_127] : memref<128x128xf32, #tpu.memory_space<vmem>>, vector<1x128xf32>
      %257 = arith.addf %251, %256 : vector<1x128xf32>
      %c4_i32_128 = arith.constant 4 : i32
      %258 = arith.addi %12, %c4_i32_128 : i32
      %259 = arith.index_cast %258 : i32 to index
      %c6_129 = arith.constant 6 : index
      %260 = memref.load %arg2[%259, %c6_129] : memref<8x8xi32, #tpu.memory_space<smem>>
      %261 = arith.index_cast %260 : i32 to index
      %c0_130 = arith.constant 0 : index
      %262 = vector.load %arg3[%261, %c0_130] : memref<128x128xf32, #tpu.memory_space<vmem>>, vector<1x128xf32>
      %263 = arith.addf %257, %262 : vector<1x128xf32>
      %c4_i32_131 = arith.constant 4 : i32
      %264 = arith.addi %12, %c4_i32_131 : i32
      %265 = arith.index_cast %264 : i32 to index
      %c7_132 = arith.constant 7 : index
      %266 = memref.load %arg2[%265, %c7_132] : memref<8x8xi32, #tpu.memory_space<smem>>
      %267 = arith.index_cast %266 : i32 to index
      %c0_133 = arith.constant 0 : index
      %268 = vector.load %arg3[%267, %c0_133] : memref<128x128xf32, #tpu.memory_space<vmem>>, vector<1x128xf32>
      %269 = arith.addf %263, %268 : vector<1x128xf32>
      %cst_134 = arith.constant 1.250000e-01 : f32
      %270 = vector.broadcast %cst_134 : f32 to vector<1x128xf32>
      %271 = arith.mulf %269, %270 : vector<1x128xf32>
      %c4_135 = arith.constant 4 : index
      %c0_136 = arith.constant 0 : index
      %272 = vector.load %arg7[%c4_135, %c0_136] : memref<8x128xf32, #tpu.memory_space<vmem>>, vector<1x128xf32>
      tpu.vector_store %arg7[%c4_135, %c0_136], %271 {strides = array<i32>} : memref<8x128xf32, #tpu.memory_space<vmem>>, vector<1x128xf32>,
      %cst_137 = arith.constant 0.000000e+00 : f32
      %273 = vector.broadcast %cst_137 : f32 to vector<1x128xf32>
      %c5_i32 = arith.constant 5 : i32
      %274 = arith.addi %12, %c5_i32 : i32
      %275 = arith.index_cast %274 : i32 to index
      %c0_138 = arith.constant 0 : index
      %276 = memref.load %arg2[%275, %c0_138] : memref<8x8xi32, #tpu.memory_space<smem>>
      %277 = arith.index_cast %276 : i32 to index
      %c0_139 = arith.constant 0 : index
      %278 = vector.load %arg3[%277, %c0_139] : memref<128x128xf32, #tpu.memory_space<vmem>>, vector<1x128xf32>
      %279 = arith.addf %273, %278 : vector<1x128xf32>
      %c5_i32_140 = arith.constant 5 : i32
      %280 = arith.addi %12, %c5_i32_140 : i32
      %281 = arith.index_cast %280 : i32 to index
      %c1_141 = arith.constant 1 : index
      %282 = memref.load %arg2[%281, %c1_141] : memref<8x8xi32, #tpu.memory_space<smem>>
      %283 = arith.index_cast %282 : i32 to index
      %c0_142 = arith.constant 0 : index
      %284 = vector.load %arg3[%283, %c0_142] : memref<128x128xf32, #tpu.memory_space<vmem>>, vector<1x128xf32>
      %285 = arith.addf %279, %284 : vector<1x128xf32>
      %c5_i32_143 = arith.constant 5 : i32
      %286 = arith.addi %12, %c5_i32_143 : i32
      %287 = arith.index_cast %286 : i32 to index
      %c2_144 = arith.constant 2 : index
      %288 = memref.load %arg2[%287, %c2_144] : memref<8x8xi32, #tpu.memory_space<smem>>
      %289 = arith.index_cast %288 : i32 to index
      %c0_145 = arith.constant 0 : index
      %290 = vector.load %arg3[%289, %c0_145] : memref<128x128xf32, #tpu.memory_space<vmem>>, vector<1x128xf32>
      %291 = arith.addf %285, %290 : vector<1x128xf32>
      %c5_i32_146 = arith.constant 5 : i32
      %292 = arith.addi %12, %c5_i32_146 : i32
      %293 = arith.index_cast %292 : i32 to index
      %c3_147 = arith.constant 3 : index
      %294 = memref.load %arg2[%293, %c3_147] : memref<8x8xi32, #tpu.memory_space<smem>>
      %295 = arith.index_cast %294 : i32 to index
      %c0_148 = arith.constant 0 : index
      %296 = vector.load %arg3[%295, %c0_148] : memref<128x128xf32, #tpu.memory_space<vmem>>, vector<1x128xf32>
      %297 = arith.addf %291, %296 : vector<1x128xf32>
      %c5_i32_149 = arith.constant 5 : i32
      %298 = arith.addi %12, %c5_i32_149 : i32
      %299 = arith.index_cast %298 : i32 to index
      %c4_150 = arith.constant 4 : index
      %300 = memref.load %arg2[%299, %c4_150] : memref<8x8xi32, #tpu.memory_space<smem>>
      %301 = arith.index_cast %300 : i32 to index
      %c0_151 = arith.constant 0 : index
      %302 = vector.load %arg3[%301, %c0_151] : memref<128x128xf32, #tpu.memory_space<vmem>>, vector<1x128xf32>
      %303 = arith.addf %297, %302 : vector<1x128xf32>
      %c5_i32_152 = arith.constant 5 : i32
      %304 = arith.addi %12, %c5_i32_152 : i32
      %305 = arith.index_cast %304 : i32 to index
      %c5_153 = arith.constant 5 : index
      %306 = memref.load %arg2[%305, %c5_153] : memref<8x8xi32, #tpu.memory_space<smem>>
      %307 = arith.index_cast %306 : i32 to index
      %c0_154 = arith.constant 0 : index
      %308 = vector.load %arg3[%307, %c0_154] : memref<128x128xf32, #tpu.memory_space<vmem>>, vector<1x128xf32>
      %309 = arith.addf %303, %308 : vector<1x128xf32>
      %c5_i32_155 = arith.constant 5 : i32
      %310 = arith.addi %12, %c5_i32_155 : i32
      %311 = arith.index_cast %310 : i32 to index
      %c6_156 = arith.constant 6 : index
      %312 = memref.load %arg2[%311, %c6_156] : memref<8x8xi32, #tpu.memory_space<smem>>
      %313 = arith.index_cast %312 : i32 to index
      %c0_157 = arith.constant 0 : index
      %314 = vector.load %arg3[%313, %c0_157] : memref<128x128xf32, #tpu.memory_space<vmem>>, vector<1x128xf32>
      %315 = arith.addf %309, %314 : vector<1x128xf32>
      %c5_i32_158 = arith.constant 5 : i32
      %316 = arith.addi %12, %c5_i32_158 : i32
      %317 = arith.index_cast %316 : i32 to index
      %c7_159 = arith.constant 7 : index
      %318 = memref.load %arg2[%317, %c7_159] : memref<8x8xi32, #tpu.memory_space<smem>>
      %319 = arith.index_cast %318 : i32 to index
      %c0_160 = arith.constant 0 : index
      %320 = vector.load %arg3[%319, %c0_160] : memref<128x128xf32, #tpu.memory_space<vmem>>, vector<1x128xf32>
      %321 = arith.addf %315, %320 : vector<1x128xf32>
      %cst_161 = arith.constant 1.250000e-01 : f32
      %322 = vector.broadcast %cst_161 : f32 to vector<1x128xf32>
      %323 = arith.mulf %321, %322 : vector<1x128xf32>
      %c5_162 = arith.constant 5 : index
      %c0_163 = arith.constant 0 : index
      %324 = vector.load %arg7[%c5_162, %c0_163] : memref<8x128xf32, #tpu.memory_space<vmem>>, vector<1x128xf32>
      tpu.vector_store %arg7[%c5_162, %c0_163], %323 {strides = array<i32>} : memref<8x128xf32, #tpu.memory_space<vmem>>, vector<1x128xf32>,
      %cst_164 = arith.constant 0.000000e+00 : f32
      %325 = vector.broadcast %cst_164 : f32 to vector<1x128xf32>
      %c6_i32 = arith.constant 6 : i32
      %326 = arith.addi %12, %c6_i32 : i32
      %327 = arith.index_cast %326 : i32 to index
      %c0_165 = arith.constant 0 : index
      %328 = memref.load %arg2[%327, %c0_165] : memref<8x8xi32, #tpu.memory_space<smem>>
      %329 = arith.index_cast %328 : i32 to index
      %c0_166 = arith.constant 0 : index
      %330 = vector.load %arg3[%329, %c0_166] : memref<128x128xf32, #tpu.memory_space<vmem>>, vector<1x128xf32>
      %331 = arith.addf %325, %330 : vector<1x128xf32>
      %c6_i32_167 = arith.constant 6 : i32
      %332 = arith.addi %12, %c6_i32_167 : i32
      %333 = arith.index_cast %332 : i32 to index
      %c1_168 = arith.constant 1 : index
      %334 = memref.load %arg2[%333, %c1_168] : memref<8x8xi32, #tpu.memory_space<smem>>
      %335 = arith.index_cast %334 : i32 to index
      %c0_169 = arith.constant 0 : index
      %336 = vector.load %arg3[%335, %c0_169] : memref<128x128xf32, #tpu.memory_space<vmem>>, vector<1x128xf32>
      %337 = arith.addf %331, %336 : vector<1x128xf32>
      %c6_i32_170 = arith.constant 6 : i32
      %338 = arith.addi %12, %c6_i32_170 : i32
      %339 = arith.index_cast %338 : i32 to index
      %c2_171 = arith.constant 2 : index
      %340 = memref.load %arg2[%339, %c2_171] : memref<8x8xi32, #tpu.memory_space<smem>>
      %341 = arith.index_cast %340 : i32 to index
      %c0_172 = arith.constant 0 : index
      %342 = vector.load %arg3[%341, %c0_172] : memref<128x128xf32, #tpu.memory_space<vmem>>, vector<1x128xf32>
      %343 = arith.addf %337, %342 : vector<1x128xf32>
      %c6_i32_173 = arith.constant 6 : i32
      %344 = arith.addi %12, %c6_i32_173 : i32
      %345 = arith.index_cast %344 : i32 to index
      %c3_174 = arith.constant 3 : index
      %346 = memref.load %arg2[%345, %c3_174] : memref<8x8xi32, #tpu.memory_space<smem>>
      %347 = arith.index_cast %346 : i32 to index
      %c0_175 = arith.constant 0 : index
      %348 = vector.load %arg3[%347, %c0_175] : memref<128x128xf32, #tpu.memory_space<vmem>>, vector<1x128xf32>
      %349 = arith.addf %343, %348 : vector<1x128xf32>
      %c6_i32_176 = arith.constant 6 : i32
      %350 = arith.addi %12, %c6_i32_176 : i32
      %351 = arith.index_cast %350 : i32 to index
      %c4_177 = arith.constant 4 : index
      %352 = memref.load %arg2[%351, %c4_177] : memref<8x8xi32, #tpu.memory_space<smem>>
      %353 = arith.index_cast %352 : i32 to index
      %c0_178 = arith.constant 0 : index
      %354 = vector.load %arg3[%353, %c0_178] : memref<128x128xf32, #tpu.memory_space<vmem>>, vector<1x128xf32>
      %355 = arith.addf %349, %354 : vector<1x128xf32>
      %c6_i32_179 = arith.constant 6 : i32
      %356 = arith.addi %12, %c6_i32_179 : i32
      %357 = arith.index_cast %356 : i32 to index
      %c5_180 = arith.constant 5 : index
      %358 = memref.load %arg2[%357, %c5_180] : memref<8x8xi32, #tpu.memory_space<smem>>
      %359 = arith.index_cast %358 : i32 to index
      %c0_181 = arith.constant 0 : index
      %360 = vector.load %arg3[%359, %c0_181] : memref<128x128xf32, #tpu.memory_space<vmem>>, vector<1x128xf32>
      %361 = arith.addf %355, %360 : vector<1x128xf32>
      %c6_i32_182 = arith.constant 6 : i32
      %362 = arith.addi %12, %c6_i32_182 : i32
      %363 = arith.index_cast %362 : i32 to index
      %c6_183 = arith.constant 6 : index
      %364 = memref.load %arg2[%363, %c6_183] : memref<8x8xi32, #tpu.memory_space<smem>>
      %365 = arith.index_cast %364 : i32 to index
      %c0_184 = arith.constant 0 : index
      %366 = vector.load %arg3[%365, %c0_184] : memref<128x128xf32, #tpu.memory_space<vmem>>, vector<1x128xf32>
      %367 = arith.addf %361, %366 : vector<1x128xf32>
      %c6_i32_185 = arith.constant 6 : i32
      %368 = arith.addi %12, %c6_i32_185 : i32
      %369 = arith.index_cast %368 : i32 to index
      %c7_186 = arith.constant 7 : index
      %370 = memref.load %arg2[%369, %c7_186] : memref<8x8xi32, #tpu.memory_space<smem>>
      %371 = arith.index_cast %370 : i32 to index
      %c0_187 = arith.constant 0 : index
      %372 = vector.load %arg3[%371, %c0_187] : memref<128x128xf32, #tpu.memory_space<vmem>>, vector<1x128xf32>
      %373 = arith.addf %367, %372 : vector<1x128xf32>
      %cst_188 = arith.constant 1.250000e-01 : f32
      %374 = vector.broadcast %cst_188 : f32 to vector<1x128xf32>
      %375 = arith.mulf %373, %374 : vector<1x128xf32>
      %c6_189 = arith.constant 6 : index
      %c0_190 = arith.constant 0 : index
      %376 = vector.load %arg7[%c6_189, %c0_190] : memref<8x128xf32, #tpu.memory_space<vmem>>, vector<1x128xf32>
      tpu.vector_store %arg7[%c6_189, %c0_190], %375 {strides = array<i32>} : memref<8x128xf32, #tpu.memory_space<vmem>>, vector<1x128xf32>,
      %cst_191 = arith.constant 0.000000e+00 : f32
      %377 = vector.broadcast %cst_191 : f32 to vector<1x128xf32>
      %c7_i32 = arith.constant 7 : i32
      %378 = arith.addi %12, %c7_i32 : i32
      %379 = arith.index_cast %378 : i32 to index
      %c0_192 = arith.constant 0 : index
      %380 = memref.load %arg2[%379, %c0_192] : memref<8x8xi32, #tpu.memory_space<smem>>
      %381 = arith.index_cast %380 : i32 to index
      %c0_193 = arith.constant 0 : index
      %382 = vector.load %arg3[%381, %c0_193] : memref<128x128xf32, #tpu.memory_space<vmem>>, vector<1x128xf32>
      %383 = arith.addf %377, %382 : vector<1x128xf32>
      %c7_i32_194 = arith.constant 7 : i32
      %384 = arith.addi %12, %c7_i32_194 : i32
      %385 = arith.index_cast %384 : i32 to index
      %c1_195 = arith.constant 1 : index
      %386 = memref.load %arg2[%385, %c1_195] : memref<8x8xi32, #tpu.memory_space<smem>>
      %387 = arith.index_cast %386 : i32 to index
      %c0_196 = arith.constant 0 : index
      %388 = vector.load %arg3[%387, %c0_196] : memref<128x128xf32, #tpu.memory_space<vmem>>, vector<1x128xf32>
      %389 = arith.addf %383, %388 : vector<1x128xf32>
      %c7_i32_197 = arith.constant 7 : i32
      %390 = arith.addi %12, %c7_i32_197 : i32
      %391 = arith.index_cast %390 : i32 to index
      %c2_198 = arith.constant 2 : index
      %392 = memref.load %arg2[%391, %c2_198] : memref<8x8xi32, #tpu.memory_space<smem>>
      %393 = arith.index_cast %392 : i32 to index
      %c0_199 = arith.constant 0 : index
      %394 = vector.load %arg3[%393, %c0_199] : memref<128x128xf32, #tpu.memory_space<vmem>>, vector<1x128xf32>
      %395 = arith.addf %389, %394 : vector<1x128xf32>
      %c7_i32_200 = arith.constant 7 : i32
      %396 = arith.addi %12, %c7_i32_200 : i32
      %397 = arith.index_cast %396 : i32 to index
      %c3_201 = arith.constant 3 : index
      %398 = memref.load %arg2[%397, %c3_201] : memref<8x8xi32, #tpu.memory_space<smem>>
      %399 = arith.index_cast %398 : i32 to index
      %c0_202 = arith.constant 0 : index
      %400 = vector.load %arg3[%399, %c0_202] : memref<128x128xf32, #tpu.memory_space<vmem>>, vector<1x128xf32>
      %401 = arith.addf %395, %400 : vector<1x128xf32>
      %c7_i32_203 = arith.constant 7 : i32
      %402 = arith.addi %12, %c7_i32_203 : i32
      %403 = arith.index_cast %402 : i32 to index
      %c4_204 = arith.constant 4 : index
      %404 = memref.load %arg2[%403, %c4_204] : memref<8x8xi32, #tpu.memory_space<smem>>
      %405 = arith.index_cast %404 : i32 to index
      %c0_205 = arith.constant 0 : index
      %406 = vector.load %arg3[%405, %c0_205] : memref<128x128xf32, #tpu.memory_space<vmem>>, vector<1x128xf32>
      %407 = arith.addf %401, %406 : vector<1x128xf32>
      %c7_i32_206 = arith.constant 7 : i32
      %408 = arith.addi %12, %c7_i32_206 : i32
      %409 = arith.index_cast %408 : i32 to index
      %c5_207 = arith.constant 5 : index
      %410 = memref.load %arg2[%409, %c5_207] : memref<8x8xi32, #tpu.memory_space<smem>>
      %411 = arith.index_cast %410 : i32 to index
      %c0_208 = arith.constant 0 : index
      %412 = vector.load %arg3[%411, %c0_208] : memref<128x128xf32, #tpu.memory_space<vmem>>, vector<1x128xf32>
      %413 = arith.addf %407, %412 : vector<1x128xf32>
      %c7_i32_209 = arith.constant 7 : i32
      %414 = arith.addi %12, %c7_i32_209 : i32
      %415 = arith.index_cast %414 : i32 to index
      %c6_210 = arith.constant 6 : index
      %416 = memref.load %arg2[%415, %c6_210] : memref<8x8xi32, #tpu.memory_space<smem>>
      %417 = arith.index_cast %416 : i32 to index
      %c0_211 = arith.constant 0 : index
      %418 = vector.load %arg3[%417, %c0_211] : memref<128x128xf32, #tpu.memory_space<vmem>>, vector<1x128xf32>
      %419 = arith.addf %413, %418 : vector<1x128xf32>
      %c7_i32_212 = arith.constant 7 : i32
      %420 = arith.addi %12, %c7_i32_212 : i32
      %421 = arith.index_cast %420 : i32 to index
      %c7_213 = arith.constant 7 : index
      %422 = memref.load %arg2[%421, %c7_213] : memref<8x8xi32, #tpu.memory_space<smem>>
      %423 = arith.index_cast %422 : i32 to index
      %c0_214 = arith.constant 0 : index
      %424 = vector.load %arg3[%423, %c0_214] : memref<128x128xf32, #tpu.memory_space<vmem>>, vector<1x128xf32>
      %425 = arith.addf %419, %424 : vector<1x128xf32>
      %cst_215 = arith.constant 1.250000e-01 : f32
      %426 = vector.broadcast %cst_215 : f32 to vector<1x128xf32>
      %427 = arith.mulf %425, %426 : vector<1x128xf32>
      %c7_216 = arith.constant 7 : index
      %c0_217 = arith.constant 0 : index
      %428 = vector.load %arg7[%c7_216, %c0_217] : memref<8x128xf32, #tpu.memory_space<vmem>>, vector<1x128xf32>
      tpu.vector_store %arg7[%c7_216, %c0_217], %427 {strides = array<i32>} : memref<8x128xf32, #tpu.memory_space<vmem>>, vector<1x128xf32>,
    } else {
    }
    %c0 = arith.constant 0 : index
    %c0_1 = arith.constant 0 : index
    %3 = vector.load %arg7[%c0, %c0_1] : memref<8x128xf32, #tpu.memory_space<vmem>>, vector<8x128xf32>
    %4 = arith.truncf %3 : vector<8x128xf32> to vector<8x128xbf16>
    %c0_2 = arith.constant 0 : index
    %c0_3 = arith.constant 0 : index
    %5 = vector.load %arg4[%c0_2, %c0_3] : memref<128x128xf32, #tpu.memory_space<vmem>>, vector<128x128xf32>
    %6 = arith.truncf %5 : vector<128x128xf32> to vector<128x128xbf16>
    %cst = arith.constant dense<0.000000e+00> : vector<8x128xf32>
    %7 = tpu.matmul %4, %6, %cst {dimension_numbers = #tpu.dot_dimension_numbers<[1], [1], [0], [0], [0, 0, 1, 0], [], []>} : vector<8x128xbf16>, vector<128x128xbf16>, vector<8x128xf32> -> vector<8x128xf32>
    %c0_4 = arith.constant 0 : index
    %c0_5 = arith.constant 0 : index
    %8 = vector.load %arg5[%c0_4, %c0_5] : memref<1x128xf32, #tpu.memory_space<vmem>>, vector<1x128xf32>
    %9 = vector.broadcast %8 : vector<1x128xf32> to vector<8x128xf32>
    %10 = arith.addf %7, %9 : vector<8x128xf32>
    %c0_6 = arith.constant 0 : index
    %c0_7 = arith.constant 0 : index
    %11 = vector.load %arg6[%c0_6, %c0_7] : memref<8x128xf32, #tpu.memory_space<vmem>>, vector<8x128xf32>
    tpu.vector_store %arg6[%c0_6, %c0_7], %10 {strides = array<i32>} : memref<8x128xf32, #tpu.memory_space<vmem>>, vector<8x128xf32>,
    return
  }
  func.func @transform_0(%arg0: i32, %arg1: i32, %arg2: memref<8x8xi32, #tpu.memory_space<smem>>) -> (i32, i32) {
    %c0_i32 = arith.constant 0 : i32
    %c0_i32_0 = arith.constant 0 : i32
    %c0_i32_1 = arith.constant 0 : i32
    return %c0_i32, %c0_i32_0 : i32, i32
  }
  func.func @transform_1(%arg0: i32, %arg1: i32, %arg2: memref<8x8xi32, #tpu.memory_space<smem>>) -> (i32, i32) {
    %c0_i32 = arith.constant 0 : i32
    %c0_i32_0 = arith.constant 0 : i32
    return %arg1, %c0_i32 : i32, i32
  }
  func.func @transform_2(%arg0: i32, %arg1: i32, %arg2: memref<8x8xi32, #tpu.memory_space<smem>>) -> (i32, i32) {
    %c0_i32 = arith.constant 0 : i32
    %c0_i32_0 = arith.constant 0 : i32
    return %c0_i32, %arg1 : i32, i32
  }
  func.func @transform_3(%arg0: i32, %arg1: i32, %arg2: memref<8x8xi32, #tpu.memory_space<smem>>) -> (i32, i32) {
    %c0_i32 = arith.constant 0 : i32
    return %arg0, %arg1 : i32, i32
  }
}

</mosaic_0001>

<llo_original>
// kernel: cbow_forward.1
$region0: #{cbow_forward.1}
  #allocation0 [shape = 'u32[]', space=smem, size = 0x4, offset = 0x4, fixed_abs, tag = 'smem constant byte address 0x4 - core index']
  #allocation1 [shape = 'u32[144,128]{1,0:T(1,128)}', space=vmem, size = 0x12000, scoped, tag = 'internal scratch']
  #allocation2 [shape = 'f32[8,128]{1,0:T(8,128)}', space=vmem, size = 0x1000, scoped, tag = 'scratch operand']
  #allocation3 [shape = 's32[1]{0}', space=sflag, size = 0x4, scoped, tag = 'scoped memory for cbow_forward.1']
  #allocation4 [shape = 'u8[4096]{0}', space=smem, size = 0x1000, scoped, tag = 'prefetched SMEM operand 0']
  %s0 = inlined_call_operand.vmem [shape: s32[8,8], index: 0, kind: input, shape index: {}]
  %s1 = inlined_call_operand.vmem [shape: f32[128,128], index: 1, kind: input, shape index: {}]
  %s2 = inlined_call_operand.vmem [shape: f32[128,128], index: 2, kind: input, shape index: {}]
  %s3 = inlined_call_operand.vmem [shape: f32[1,128], index: 3, kind: input, shape index: {}]
  %s4 = inlined_call_operand.vmem [shape: f32[8,128], index: 4, kind: output, shape index: {}]
  %s5 = sld [smem:[#allocation0]]
  $region26: #{cbow_forward.1} parent=0
    _
  %s7 = ssub.s32 1, %s5
  %s8 = scalar_select 0, %s7, %s5
  %s9 = sshll.u32 %s0, 4
  %s10 = int_to_ptr.vmem [resolvable:$true] %s9
  %12 = dma.vmem_to_smem %s10, 128, [#allocation4], [#allocation3]
  %13 = dma.done [#allocation3], 128
  %14 = sfence
  // Predicated region
  $region2: #{cbow_forward.1} parent=0 // pred_check
    _
  $region3: #{cbow_forward.1} parent=0 // pred_check_branch
    %16 = sbr.rel (0) target = $region5
  $region4: #{cbow_forward.1} parent=0 // pred_region
    _
  $region5: #{cbow_forward.1} parent=0 // pred_fallthru
    _
  // Predicated region
  $region6: #{cbow_forward.1} parent=0 // pred_check
    _
  $region7: #{cbow_forward.1} parent=0 // pred_check_branch
    %18 = sbr.rel (0) target = $region9
  $region8: #{cbow_forward.1} parent=0 // pred_region
    _
  $region9: #{cbow_forward.1} parent=0 // pred_fallthru
    _
  // Predicated region
  $region10: #{cbow_forward.1} parent=0 // pred_check
    _
  $region11: #{cbow_forward.1} parent=0 // pred_check_branch
    %20 = sbr.rel (0) target = $region13
  $region12: #{cbow_forward.1} parent=0 // pred_region
    _
  $region13: #{cbow_forward.1} parent=0 // pred_fallthru
    _
  %p22 = scmp.eq.s32.totalorder 0, 0
  // Predicated region
  $region14: #{cbow_forward.1} parent=0 // pred_check
    %p23 = pneg %p22
  $region15: #{cbow_forward.1} parent=0 // pred_check_branch
    %25 = sbr.rel (%p23) target = $region17
  $region16: #{cbow_forward.1} parent=0 // pred_region
    %s26 = smul.u32 0, 8
    %s27 = smul.u32 %s26, 128
    %s28 = sld [smem:[#allocation4 + %s27]]
    %s29 = scalar_lea.vmem %s1, %s28
    %v30 = vld [vmem:[%s29] sm:$0x1]
    %v31 = vadd.f32 %v30, 0.0
    %s32 = sadd.s32 %s27, 1
    %s33 = sld [smem:[#allocation4 + %s32]]
    %s34 = scalar_lea.vmem %s1, %s33
    %v35 = vld [vmem:[%s34] sm:$0x1]
    %v36 = vadd.f32 %v31, %v35
    %s37 = sadd.s32 %s27, 2
    %s38 = sld [smem:[#allocation4 + %s37]]
    %s39 = scalar_lea.vmem %s1, %s38
    %v40 = vld [vmem:[%s39] sm:$0x1]
    %v41 = vadd.f32 %v36, %v40
    %s42 = sadd.s32 %s27, 3
    %s43 = sld [smem:[#allocation4 + %s42]]
    %s44 = scalar_lea.vmem %s1, %s43
    %v45 = vld [vmem:[%s44] sm:$0x1]
    %v46 = vadd.f32 %v41, %v45
    %s47 = sadd.s32 %s27, 4
    %s48 = sld [smem:[#allocation4 + %s47]]
    %s49 = scalar_lea.vmem %s1, %s48
    %v50 = vld [vmem:[%s49] sm:$0x1]
    %v51 = vadd.f32 %v46, %v50
    %s52 = sadd.s32 %s27, 5
    %s53 = sld [smem:[#allocation4 + %s52]]
    %s54 = scalar_lea.vmem %s1, %s53
    %v55 = vld [vmem:[%s54] sm:$0x1]
    %v56 = vadd.f32 %v51, %v55
    %s57 = sadd.s32 %s27, 6
    %s58 = sld [smem:[#allocation4 + %s57]]
    %s59 = scalar_lea.vmem %s1, %s58
    %v60 = vld [vmem:[%s59] sm:$0x1]
    %v61 = vadd.f32 %v56, %v60
    %s62 = sadd.s32 %s27, 7
    %s63 = sld [smem:[#allocation4 + %s62]]
    %s64 = scalar_lea.vmem %s1, %s63
    %v65 = vld [vmem:[%s64] sm:$0x1]
    %v66 = vadd.f32 %v61, %v65
    %v67 = vmul.f32 %v66, 0.125
    %68 = vst [vmem:[#allocation2] sm:$0x1] %v67
    %s69 = sadd.s32 %s26, 1
    %s70 = smul.u32 %s69, 128
    %s71 = sld [smem:[#allocation4 + %s70]]
    %s72 = scalar_lea.vmem %s1, %s71
    %v73 = vld [vmem:[%s72] sm:$0x1]
    %v74 = vadd.f32 %v73, 0.0
    %s75 = sadd.s32 %s70, 1
    %s76 = sld [smem:[#allocation4 + %s75]]
    %s77 = scalar_lea.vmem %s1, %s76
    %v78 = vld [vmem:[%s77] sm:$0x1]
    %v79 = vadd.f32 %v74, %v78
    %s80 = sadd.s32 %s70, 2
    %s81 = sld [smem:[#allocation4 + %s80]]
    %s82 = scalar_lea.vmem %s1, %s81
    %v83 = vld [vmem:[%s82] sm:$0x1]
    %v84 = vadd.f32 %v79, %v83
    %s85 = sadd.s32 %s70, 3
    %s86 = sld [smem:[#allocation4 + %s85]]
    %s87 = scalar_lea.vmem %s1, %s86
    %v88 = vld [vmem:[%s87] sm:$0x1]
    %v89 = vadd.f32 %v84, %v88
    %s90 = sadd.s32 %s70, 4
    %s91 = sld [smem:[#allocation4 + %s90]]
    %s92 = scalar_lea.vmem %s1, %s91
    %v93 = vld [vmem:[%s92] sm:$0x1]
    %v94 = vadd.f32 %v89, %v93
    %s95 = sadd.s32 %s70, 5
    %s96 = sld [smem:[#allocation4 + %s95]]
    %s97 = scalar_lea.vmem %s1, %s96
    %v98 = vld [vmem:[%s97] sm:$0x1]
    %v99 = vadd.f32 %v94, %v98
    %s100 = sadd.s32 %s70, 6
    %s101 = sld [smem:[#allocation4 + %s100]]
    %s102 = scalar_lea.vmem %s1, %s101
    %v103 = vld [vmem:[%s102] sm:$0x1]
    %v104 = vadd.f32 %v99, %v103
    %s105 = sadd.s32 %s70, 7
    %s106 = sld [smem:[#allocation4 + %s105]]
    %s107 = scalar_lea.vmem %s1, %s106
    %v108 = vld [vmem:[%s107] sm:$0x1]
    %v109 = vadd.f32 %v104, %v108
    %v110 = vmul.f32 %v109, 0.125
    %111 = vst [vmem:[#allocation2 + $0x1] sm:$0x1] %v110
    %s112 = sadd.s32 %s26, 2
    %s113 = smul.u32 %s112, 128
    %s114 = sld [smem:[#allocation4 + %s113]]
    %s115 = scalar_lea.vmem %s1, %s114
    %v116 = vld [vmem:[%s115] sm:$0x1]
    %v117 = vadd.f32 %v116, 0.0
    %s118 = sadd.s32 %s113, 1
    %s119 = sld [smem:[#allocation4 + %s118]]
    %s120 = scalar_lea.vmem %s1, %s119
    %v121 = vld [vmem:[%s120] sm:$0x1]
    %v122 = vadd.f32 %v117, %v121
    %s123 = sadd.s32 %s113, 2
    %s124 = sld [smem:[#allocation4 + %s123]]
    %s125 = scalar_lea.vmem %s1, %s124
    %v126 = vld [vmem:[%s125] sm:$0x1]
    %v127 = vadd.f32 %v122, %v126
    %s128 = sadd.s32 %s113, 3
    %s129 = sld [smem:[#allocation4 + %s128]]
    %s130 = scalar_lea.vmem %s1, %s129
    %v131 = vld [vmem:[%s130] sm:$0x1]
    %v132 = vadd.f32 %v127, %v131
    %s133 = sadd.s32 %s113, 4
    %s134 = sld [smem:[#allocation4 + %s133]]
    %s135 = scalar_lea.vmem %s1, %s134
    %v136 = vld [vmem:[%s135] sm:$0x1]
    %v137 = vadd.f32 %v132, %v136
    %s138 = sadd.s32 %s113, 5
    %s139 = sld [smem:[#allocation4 + %s138]]
    %s140 = scalar_lea.vmem %s1, %s139
    %v141 = vld [vmem:[%s140] sm:$0x1]
    %v142 = vadd.f32 %v137, %v141
    %s143 = sadd.s32 %s113, 6
    %s144 = sld [smem:[#allocation4 + %s143]]
    %s145 = scalar_lea.vmem %s1, %s144
    %v146 = vld [vmem:[%s145] sm:$0x1]
    %v147 = vadd.f32 %v142, %v146
    %s148 = sadd.s32 %s113, 7
    %s149 = sld [smem:[#allocation4 + %s148]]
    %s150 = scalar_lea.vmem %s1, %s149
    %v151 = vld [vmem:[%s150] sm:$0x1]
    %v152 = vadd.f32 %v147, %v151
    %v153 = vmul.f32 %v152, 0.125
    %154 = vst [vmem:[#allocation2 + $0x2] sm:$0x1] %v153
    %s155 = sadd.s32 %s26, 3
    %s156 = smul.u32 %s155, 128
    %s157 = sld [smem:[#allocation4 + %s156]]
    %s158 = scalar_lea.vmem %s1, %s157
    %v159 = vld [vmem:[%s158] sm:$0x1]
    %v160 = vadd.f32 %v159, 0.0
    %s161 = sadd.s32 %s156, 1
    %s162 = sld [smem:[#allocation4 + %s161]]
    %s163 = scalar_lea.vmem %s1, %s162
    %v164 = vld [vmem:[%s163] sm:$0x1]
    %v165 = vadd.f32 %v160, %v164
    %s166 = sadd.s32 %s156, 2
    %s167 = sld [smem:[#allocation4 + %s166]]
    %s168 = scalar_lea.vmem %s1, %s167
    %v169 = vld [vmem:[%s168] sm:$0x1]
    %v170 = vadd.f32 %v165, %v169
    %s171 = sadd.s32 %s156, 3
    %s172 = sld [smem:[#allocation4 + %s171]]
    %s173 = scalar_lea.vmem %s1, %s172
    %v174 = vld [vmem:[%s173] sm:$0x1]
    %v175 = vadd.f32 %v170, %v174
    %s176 = sadd.s32 %s156, 4
    %s177 = sld [smem:[#allocation4 + %s176]]
    %s178 = scalar_lea.vmem %s1, %s177
    %v179 = vld [vmem:[%s178] sm:$0x1]
    %v180 = vadd.f32 %v175, %v179
    %s181 = sadd.s32 %s156, 5
    %s182 = sld [smem:[#allocation4 + %s181]]
    %s183 = scalar_lea.vmem %s1, %s182
    %v184 = vld [vmem:[%s183] sm:$0x1]
    %v185 = vadd.f32 %v180, %v184
    %s186 = sadd.s32 %s156, 6
    %s187 = sld [smem:[#allocation4 + %s186]]
    %s188 = scalar_lea.vmem %s1, %s187
    %v189 = vld [vmem:[%s188] sm:$0x1]
    %v190 = vadd.f32 %v185, %v189
    %s191 = sadd.s32 %s156, 7
    %s192 = sld [smem:[#allocation4 + %s191]]
    %s193 = scalar_lea.vmem %s1, %s192
    %v194 = vld [vmem:[%s193] sm:$0x1]
    %v195 = vadd.f32 %v190, %v194
    %v196 = vmul.f32 %v195, 0.125
    %197 = vst [vmem:[#allocation2 + $0x3] sm:$0x1] %v196
    %s198 = sadd.s32 %s26, 4
    %s199 = smul.u32 %s198, 128
    %s200 = sld [smem:[#allocation4 + %s199]]
    %s201 = scalar_lea.vmem %s1, %s200
    %v202 = vld [vmem:[%s201] sm:$0x1]
    %v203 = vadd.f32 %v202, 0.0
    %s204 = sadd.s32 %s199, 1
    %s205 = sld [smem:[#allocation4 + %s204]]
    %s206 = scalar_lea.vmem %s1, %s205
    %v207 = vld [vmem:[%s206] sm:$0x1]
    %v208 = vadd.f32 %v203, %v207
    %s209 = sadd.s32 %s199, 2
    %s210 = sld [smem:[#allocation4 + %s209]]
    %s211 = scalar_lea.vmem %s1, %s210
    %v212 = vld [vmem:[%s211] sm:$0x1]
    %v213 = vadd.f32 %v208, %v212
    %s214 = sadd.s32 %s199, 3
    %s215 = sld [smem:[#allocation4 + %s214]]
    %s216 = scalar_lea.vmem %s1, %s215
    %v217 = vld [vmem:[%s216] sm:$0x1]
    %v218 = vadd.f32 %v213, %v217
    %s219 = sadd.s32 %s199, 4
    %s220 = sld [smem:[#allocation4 + %s219]]
    %s221 = scalar_lea.vmem %s1, %s220
    %v222 = vld [vmem:[%s221] sm:$0x1]
    %v223 = vadd.f32 %v218, %v222
    %s224 = sadd.s32 %s199, 5
    %s225 = sld [smem:[#allocation4 + %s224]]
    %s226 = scalar_lea.vmem %s1, %s225
    %v227 = vld [vmem:[%s226] sm:$0x1]
    %v228 = vadd.f32 %v223, %v227
    %s229 = sadd.s32 %s199, 6
    %s230 = sld [smem:[#allocation4 + %s229]]
    %s231 = scalar_lea.vmem %s1, %s230
    %v232 = vld [vmem:[%s231] sm:$0x1]
    %v233 = vadd.f32 %v228, %v232
    %s234 = sadd.s32 %s199, 7
    %s235 = sld [smem:[#allocation4 + %s234]]
    %s236 = scalar_lea.vmem %s1, %s235
    %v237 = vld [vmem:[%s236] sm:$0x1]
    %v238 = vadd.f32 %v233, %v237
    %v239 = vmul.f32 %v238, 0.125
    %240 = vst [vmem:[#allocation2 + $0x4] sm:$0x1] %v239
    %s241 = sadd.s32 %s26, 5
    %s242 = smul.u32 %s241, 128
    %s243 = sld [smem:[#allocation4 + %s242]]
    %s244 = scalar_lea.vmem %s1, %s243
    %v245 = vld [vmem:[%s244] sm:$0x1]
    %v246 = vadd.f32 %v245, 0.0
    %s247 = sadd.s32 %s242, 1
    %s248 = sld [smem:[#allocation4 + %s247]]
    %s249 = scalar_lea.vmem %s1, %s248
    %v250 = vld [vmem:[%s249] sm:$0x1]
    %v251 = vadd.f32 %v246, %v250
    %s252 = sadd.s32 %s242, 2
    %s253 = sld [smem:[#allocation4 + %s252]]
    %s254 = scalar_lea.vmem %s1, %s253
    %v255 = vld [vmem:[%s254] sm:$0x1]
    %v256 = vadd.f32 %v251, %v255
    %s257 = sadd.s32 %s242, 3
    %s258 = sld [smem:[#allocation4 + %s257]]
    %s259 = scalar_lea.vmem %s1, %s258
    %v260 = vld [vmem:[%s259] sm:$0x1]
    %v261 = vadd.f32 %v256, %v260
    %s262 = sadd.s32 %s242, 4
    %s263 = sld [smem:[#allocation4 + %s262]]
    %s264 = scalar_lea.vmem %s1, %s263
    %v265 = vld [vmem:[%s264] sm:$0x1]
    %v266 = vadd.f32 %v261, %v265
    %s267 = sadd.s32 %s242, 5
    %s268 = sld [smem:[#allocation4 + %s267]]
    %s269 = scalar_lea.vmem %s1, %s268
    %v270 = vld [vmem:[%s269] sm:$0x1]
    %v271 = vadd.f32 %v266, %v270
    %s272 = sadd.s32 %s242, 6
    %s273 = sld [smem:[#allocation4 + %s272]]
    %s274 = scalar_lea.vmem %s1, %s273
    %v275 = vld [vmem:[%s274] sm:$0x1]
    %v276 = vadd.f32 %v271, %v275
    %s277 = sadd.s32 %s242, 7
    %s278 = sld [smem:[#allocation4 + %s277]]
    %s279 = scalar_lea.vmem %s1, %s278
    %v280 = vld [vmem:[%s279] sm:$0x1]
    %v281 = vadd.f32 %v276, %v280
    %v282 = vmul.f32 %v281, 0.125
    %283 = vst [vmem:[#allocation2 + $0x5] sm:$0x1] %v282
    %s284 = sadd.s32 %s26, 6
    %s285 = smul.u32 %s284, 128
    %s286 = sld [smem:[#allocation4 + %s285]]
    %s287 = scalar_lea.vmem %s1, %s286
    %v288 = vld [vmem:[%s287] sm:$0x1]
    %v289 = vadd.f32 %v288, 0.0
    %s290 = sadd.s32 %s285, 1
    %s291 = sld [smem:[#allocation4 + %s290]]
    %s292 = scalar_lea.vmem %s1, %s291
    %v293 = vld [vmem:[%s292] sm:$0x1]
    %v294 = vadd.f32 %v289, %v293
    %s295 = sadd.s32 %s285, 2
    %s296 = sld [smem:[#allocation4 + %s295]]
    %s297 = scalar_lea.vmem %s1, %s296
    %v298 = vld [vmem:[%s297] sm:$0x1]
    %v299 = vadd.f32 %v294, %v298
    %s300 = sadd.s32 %s285, 3
    %s301 = sld [smem:[#allocation4 + %s300]]
    %s302 = scalar_lea.vmem %s1, %s301
    %v303 = vld [vmem:[%s302] sm:$0x1]
    %v304 = vadd.f32 %v299, %v303
    %s305 = sadd.s32 %s285, 4
    %s306 = sld [smem:[#allocation4 + %s305]]
    %s307 = scalar_lea.vmem %s1, %s306
    %v308 = vld [vmem:[%s307] sm:$0x1]
    %v309 = vadd.f32 %v304, %v308
    %s310 = sadd.s32 %s285, 5
    %s311 = sld [smem:[#allocation4 + %s310]]
    %s312 = scalar_lea.vmem %s1, %s311
    %v313 = vld [vmem:[%s312] sm:$0x1]
    %v314 = vadd.f32 %v309, %v313
    %s315 = sadd.s32 %s285, 6
    %s316 = sld [smem:[#allocation4 + %s315]]
    %s317 = scalar_lea.vmem %s1, %s316
    %v318 = vld [vmem:[%s317] sm:$0x1]
    %v319 = vadd.f32 %v314, %v318
    %s320 = sadd.s32 %s285, 7
    %s321 = sld [smem:[#allocation4 + %s320]]
    %s322 = scalar_lea.vmem %s1, %s321
    %v323 = vld [vmem:[%s322] sm:$0x1]
    %v324 = vadd.f32 %v319, %v323
    %v325 = vmul.f32 %v324, 0.125
    %326 = vst [vmem:[#allocation2 + $0x6] sm:$0x1] %v325
    %s327 = sadd.s32 %s26, 7
    %s328 = smul.u32 %s327, 128
    %s329 = sld [smem:[#allocation4 + %s328]]
    %s330 = scalar_lea.vmem %s1, %s329
    %v331 = vld [vmem:[%s330] sm:$0x1]
    %v332 = vadd.f32 %v331, 0.0
    %s333 = sadd.s32 %s328, 1
    %s334 = sld [smem:[#allocation4 + %s333]]
    %s335 = scalar_lea.vmem %s1, %s334
    %v336 = vld [vmem:[%s335] sm:$0x1]
    %v337 = vadd.f32 %v332, %v336
    %s338 = sadd.s32 %s328, 2
    %s339 = sld [smem:[#allocation4 + %s338]]
    %s340 = scalar_lea.vmem %s1, %s339
    %v341 = vld [vmem:[%s340] sm:$0x1]
    %v342 = vadd.f32 %v337, %v341
    %s343 = sadd.s32 %s328, 3
    %s344 = sld [smem:[#allocation4 + %s343]]
    %s345 = scalar_lea.vmem %s1, %s344
    %v346 = vld [vmem:[%s345] sm:$0x1]
    %v347 = vadd.f32 %v342, %v346
    %s348 = sadd.s32 %s328, 4
    %s349 = sld [smem:[#allocation4 + %s348]]
    %s350 = scalar_lea.vmem %s1, %s349
    %v351 = vld [vmem:[%s350] sm:$0x1]
    %v352 = vadd.f32 %v347, %v351
    %s353 = sadd.s32 %s328, 5
    %s354 = sld [smem:[#allocation4 + %s353]]
    %s355 = scalar_lea.vmem %s1, %s354
    %v356 = vld [vmem:[%s355] sm:$0x1]
    %v357 = vadd.f32 %v352, %v356
    %s358 = sadd.s32 %s328, 6
    %s359 = sld [smem:[#allocation4 + %s358]]
    %s360 = scalar_lea.vmem %s1, %s359
    %v361 = vld [vmem:[%s360] sm:$0x1]
    %v362 = vadd.f32 %v357, %v361
    %s363 = sadd.s32 %s328, 7
    %s364 = sld [smem:[#allocation4 + %s363]]
    %s365 = scalar_lea.vmem %s1, %s364
    %v366 = vld [vmem:[%s365] sm:$0x1]
    %v367 = vadd.f32 %v362, %v366
    %v368 = vmul.f32 %v367, 0.125
    %369 = vst [vmem:[#allocation2 + $0x7] sm:$0x1] %v368
  $region17: #{cbow_forward.1} parent=0 // pred_fallthru
    _
  %v370 = vld [vmem:[#allocation2] sm:$0xff]
  %v371 = vpack.c.bf16 %v370, %v370
  %v372 = vld [vmem:[%s2] sm:$0xff]
  %v373 = vld [vmem:[%s2 + $0x8] sm:$0xff]
  %v374 = vld [vmem:[%s2 + $0x10] sm:$0xff]
  %v375 = vld [vmem:[%s2 + $0x18] sm:$0xff]
  %v376 = vld [vmem:[%s2 + $0x20] sm:$0xff]
  %v377 = vld [vmem:[%s2 + $0x28] sm:$0xff]
  %v378 = vld [vmem:[%s2 + $0x30] sm:$0xff]
  %v379 = vld [vmem:[%s2 + $0x38] sm:$0xff]
  %v380 = vld [vmem:[%s2 + $0x40] sm:$0xff]
  %v381 = vld [vmem:[%s2 + $0x48] sm:$0xff]
  %v382 = vld [vmem:[%s2 + $0x50] sm:$0xff]
  %v383 = vld [vmem:[%s2 + $0x58] sm:$0xff]
  %v384 = vld [vmem:[%s2 + $0x60] sm:$0xff]
  %v385 = vld [vmem:[%s2 + $0x68] sm:$0xff]
  %v386 = vld [vmem:[%s2 + $0x70] sm:$0xff]
  %v387 = vld [vmem:[%s2 + $0x78] sm:$0xff]
  %v388 = vpack.c.bf16 %v373, %v372
  %v389 = vpack.c.bf16 %v375, %v374
  %v390 = vpack.c.bf16 %v377, %v376
  %v391 = vpack.c.bf16 %v379, %v378
  %v392 = vpack.c.bf16 %v381, %v380
  %v393 = vpack.c.bf16 %v383, %v382
  %v394 = vpack.c.bf16 %v385, %v384
  %v395 = vpack.c.bf16 %v387, %v386
  %v396 = vld [vmem:[%s3] sm:$0x1]
  %v398 = vlaneseq
  %v399 = vshrl.u32 %v398, 7
  %v400 = vsub.s32 0, %v399
  %v401 = vrot.slane %v396, %v400
  %403 = vmatprep.subr.bf16.mxu0 0
  %404 = vmatpush1.bf16.xpose.msra.mxu0 %v388
  %405 = vmatprep.subr.bf16.mxu0 0
  %406 = vmatpush1.bf16.xpose.msra.mxu0 %v389
  %407 = vmatprep.subr.bf16.mxu0 0
  %408 = vmatpush1.bf16.xpose.msra.mxu0 %v390
  %409 = vmatprep.subr.bf16.mxu0 0
  %410 = vmatpush1.bf16.xpose.msra.mxu0 %v391
  %411 = vmatprep.subr.bf16.mxu0 0
  %412 = vmatpush1.bf16.xpose.msra.mxu0 %v392
  %413 = vmatprep.subr.bf16.mxu0 0
  %414 = vmatpush1.bf16.xpose.msra.mxu0 %v393
  %415 = vmatprep.subr.bf16.mxu0 0
  %416 = vmatpush1.bf16.xpose.msra.mxu0 %v394
  %417 = vmatprep.subr.bf16.mxu0 0
  %418 = vmatpush1.bf16.xpose.msra.mxu0 %v395
  %419 = vmatprep.subr.bf16.mxu0 0
  %420 = vmatpush1.bf16.xpose.msra.mxu0 0
  %421 = vmatprep.subr.bf16.mxu0 0
  %422 = vmatpush1.bf16.xpose.msra.mxu0 0
  %423 = vmatprep.subr.bf16.mxu0 0
  %424 = vmatpush1.bf16.xpose.msra.mxu0 0
  %425 = vmatprep.subr.bf16.mxu0 0
  %426 = vmatpush1.bf16.xpose.msra.mxu0 0
  %427 = vmatprep.subr.bf16.mxu0 0
  %428 = vmatpush1.bf16.xpose.msra.mxu0 0
  %429 = vmatprep.subr.bf16.mxu0 0
  %430 = vmatpush1.bf16.xpose.msra.mxu0 0
  %431 = vmatprep.subr.bf16.mxu0 0
  %432 = vmatpush1.bf16.xpose.msra.mxu0 0
  %433 = vmatprep.subr.bf16.mxu0 0
  %434 = vmatpush1.bf16.xpose.msra.mxu0 0
  %435 = vmatprep.mubr.bf16.mxu0 0
  %436 = vmatmul.mubr.bf16.gmra.mrb[0].mxu0 %v371
  %v437 = vpop.f32.mrb[0].mxu0
  %v438 = vadd.f32 %v401, %v437
  %v439 = vpop.f32.mrb[0].mxu0
  %v440 = vpop.f32.mrb[0].mxu0
  %v441 = vpop.f32.mrb[0].mxu0
  %442 = vdwg.mxu0
  %443 = vst [vmem:[%s4] sm:$0xff] %v438
  // Predicated region
  $region18: #{cbow_forward.1} parent=0 // pred_check
    _
  $region19: #{cbow_forward.1} parent=0 // pred_check_branch
    %445 = sbr.rel (0) target = $region21
  $region20: #{cbow_forward.1} parent=0 // pred_region
    _
  $region21: #{cbow_forward.1} parent=0 // pred_fallthru
    _
  // Predicated region
  $region22: #{cbow_forward.1} parent=0 // pred_check
    _
  $region23: #{cbow_forward.1} parent=0 // pred_check_branch
    %447 = sbr.rel (0) target = $region25
  $region24: #{cbow_forward.1} parent=0 // pred_region
    _
  $region25: #{cbow_forward.1} parent=0 // pred_fallthru
    _

</llo_original>
